<compile_context>
chip_gen: v7x
topology: tpu7x:2x2x1
jax: 0.10.0
libtpu: 0.0.40
codegen_flags: <defaults>
</compile_context>

<pallas_src>
import jax
import jax.numpy as jnp
from jax import lax
from jax.experimental import pallas as pl
from jax.experimental.pallas import tpu as pltpu


TILE_N_MAX = 512  # lane-width tile over the candidate axis (review: 512 ~ 85% of HBM roofline)


def _round_up(x, m):
    return ((x + m - 1) // m) * m


# ----------------------------------------------------------------------------
# Candidate-scoring kernel (tiled over N, fully independent tiles).
#   cand_ref : (TILE_N, F)   natural layout tile of candidates
#   w1_ref   : (E_out, F)    fc1 weight (row E is a zero row used as bias carrier)
#   b1_ref   : (E_out, 1)    fc1 bias; b1[E] = 1 so h1[E, :] == 1 after relu
#   w2_ref   : (1, E_out)    fc2 weight; w2[0, E] = fc2 bias
#   scores_ref : (1, TILE_N) lane-dense scores row
# ----------------------------------------------------------------------------
def _score_kernel(cand_ref, w1_ref, b1_ref, w2_ref, scores_ref):
    # h1[e, n] = sum_f w1[e, f] * cand[n, f]   -> (E_out, TILE_N), lane-dense in N
    h1 = lax.dot_general(
        w1_ref[...], cand_ref[...],
        dimension_numbers=(((1,), (1,)), ((), ())),
        preferred_element_type=jnp.float32)
    h1 = jnp.maximum(h1 + b1_ref[...], 0.0)                 # relu(fc1(c)) ; bias broadcast over lanes
    s = jnp.dot(w2_ref[...], h1,
                preferred_element_type=jnp.float32)         # (1, TILE_N); fc2 bias via h1[E,:]==1
    scores_ref[...] = jax.nn.sigmoid(jnp.maximum(s, 0.0))   # sigmoid(relu(fc2(.)))


# ----------------------------------------------------------------------------
# Single LSTM step (tiny; runs once, no grid).  PyTorch gate order: i, f, g, o.
#   xh_ref : (1, K_pad)  = [x, h, 1, 0...]
#   wl_ref : (K_pad, 4*HG) combined [W_ih^T ; W_hh^T ; b_ih+b_hh], per-gate
#            128-lane segments so gate slices are vreg-aligned.
#   c0_ref : (1, HG)
# ----------------------------------------------------------------------------
def _lstm_kernel(xh_ref, wl_ref, c0_ref, h_out_ref, c_out_ref):
    hg = c0_ref.shape[1]
    gates = jnp.dot(xh_ref[...], wl_ref[...],
                    preferred_element_type=jnp.float32)     # (1, 4*hg)
    i_g = jax.nn.sigmoid(gates[:, 0 * hg:1 * hg])
    f_g = jax.nn.sigmoid(gates[:, 1 * hg:2 * hg])
    g_g = jnp.tanh(gates[:, 2 * hg:3 * hg])
    o_g = jax.nn.sigmoid(gates[:, 3 * hg:4 * hg])
    c_new = f_g * c0_ref[...] + i_g * g_g
    h_out_ref[...] = o_g * jnp.tanh(c_new)
    c_out_ref[...] = c_new


# ----------------------------------------------------------------------------
# One-time parameter preparation: pad, pre-transpose, fold biases.
# ----------------------------------------------------------------------------
def prepare_params(params, use_bf16=False):
    E, H = params["E"], params["H"]
    F = E + 2 * H                   # fc1 input width (candidate feature dim)
    K = E + H                       # LSTM [x, h] width
    E_out = _round_up(E + 1, 8)     # fc1 output rows + 1 bias-carrier row (sublane-aligned only)
    K_pad = _round_up(K + 1, 128)   # +1: constant-1 slot for LSTM bias
    HG = _round_up(H, 128)          # per-gate lane segment width

    # fc1 (E, F); row E left zero so h1[E,:] = relu(0 + b1[E]=1) = 1.
    w1 = jnp.zeros((E_out, F), jnp.float32).at[:E, :].set(params["fc1_w"])
    b1 = (jnp.zeros((E_out, 1), jnp.float32)
          .at[:E, 0].set(params["fc1_b"])
          .at[E, 0].set(1.0))
    # fc2 (1, E); its bias rides the constant-1 row of h1.
    w2 = (jnp.zeros((1, E_out), jnp.float32)
          .at[0, :E].set(params["fc2_w"][0])
          .at[0, E].set(params["fc2_b"][0]))

    # LSTM: combined [W_ih^T ; W_hh^T ; (b_ih + b_hh)], each gate in its own
    # 128-lane segment (vreg-aligned gate slices, unmasked h/c stores).
    wl = jnp.zeros((K_pad, 4 * HG), jnp.float32)
    b_sum = params["b_ih"] + params["b_hh"]
    for g in range(4):  # PyTorch gate order: i, f, g, o
        wl = wl.at[:E, g * HG:g * HG + H].set(params["w_ih"][g * H:(g + 1) * H, :].T)
        wl = wl.at[E:E + H, g * HG:g * HG + H].set(params["w_hh"][g * H:(g + 1) * H, :].T)
        wl = wl.at[K, g * HG:g * HG + H].set(b_sum[g * H:(g + 1) * H])

    # NOTE: with use_bf16=True the fc1 weights are rounded to bf16; only use it
    # when the candidate producer already emits bf16 (otherwise the wrapper
    # cast adds back the HBM pass we just removed).
    cand_dtype = jnp.bfloat16 if use_bf16 else jnp.float32
    return {
        "E": E, "H": H, "F": F, "K": K,
        "E_out": E_out, "K_pad": K_pad, "HG": HG,
        "w1": w1.astype(cand_dtype), "b1": b1, "w2": w2, "wl": wl,
        "cand_dtype": cand_dtype,
    }


# ----------------------------------------------------------------------------
# Wrapper: ArgPolicy.forward
# ----------------------------------------------------------------------------
def arg_policy_forward(prep, x, candidates, hidden):
    """x: (E,)-like; candidates: (N, E+2H) or (N,1,E+2H); hidden: (h0, c0)
    each (1, 1, H).  Returns ((h, c), scores) with PyTorch shapes."""
    E, H, F, K = prep["E"], prep["H"], prep["F"], prep["K"]
    E_out, K_pad, HG = prep["E_out"], prep["K_pad"], prep["HG"]

    N = candidates.shape[0]
    cand2d = candidates.reshape(N, F)          # natural (N, F) layout; no pad, no transpose
    if cand2d.dtype != prep["cand_dtype"]:
        cand2d = cand2d.astype(prep["cand_dtype"])

    # Tile the candidate axis; small N gets a single exact-fit tile.
    tile_n = min(TILE_N_MAX, _round_up(N, 8))
    n_tiles = pl.cdiv(N, tile_n)
    n_out = n_tiles * tile_n                   # padded output row is ours to allocate (free)

    itemsize = jnp.dtype(prep["cand_dtype"]).itemsize
    cost = pl.CostEstimate(
        flops=2 * N * F * E_out + 2 * N * E_out,
        transcendentals=N,
        bytes_accessed=N * F * itemsize + (E_out * F) * itemsize
        + (E_out + E_out) * 4 + n_out * 4,
    )

    scores_row = pl.pallas_call(
        _score_kernel,
        out_shape=jax.ShapeDtypeStruct((1, n_out), jnp.float32),
        grid_spec=pltpu.PrefetchScalarGridSpec(
            num_scalar_prefetch=0,
            grid=(n_tiles,),
            in_specs=[
                pl.BlockSpec((tile_n, F), lambda i: (i, 0)),   # candidate tile, natural layout
                pl.BlockSpec((E_out, F), lambda i: (0, 0)),    # fc1 weights (constant block)
                pl.BlockSpec((E_out, 1), lambda i: (0, 0)),    # fc1 bias (+1 carrier)
                pl.BlockSpec((1, E_out), lambda i: (0, 0)),    # fc2 weights (+bias)
            ],
            out_specs=pl.BlockSpec((1, tile_n), lambda i: (0, i)),  # lane-dense scores tile
        ),
        # No grid-resident state -> candidate axis can be sharded across
        # TensorCores (v7x megacore); no-op on single-TC chips.
        compiler_params=pltpu.CompilerParams(dimension_semantics=("parallel",)),
        cost_estimate=cost,
    )(cand2d, prep["w1"], prep["b1"], prep["w2"])

    # --- single LSTM step: tiny no-grid pallas_call --------------------------
    x_row = x.reshape(E).astype(jnp.float32)
    h0 = hidden[0].reshape(H).astype(jnp.float32)
    c0 = hidden[1].reshape(H).astype(jnp.float32)
    xh = (jnp.zeros((1, K_pad), jnp.float32)
          .at[0, :E].set(x_row).at[0, E:E + H].set(h0).at[0, K].set(1.0))
    c0p = jnp.zeros((1, HG), jnp.float32).at[0, :H].set(c0)

    # TODO(synk): in a rollout loop, alias (h, c) in place via
    # input_output_aliases and batch steps over a leading grid axis to
    # amortize the per-call dispatch overhead.
    h_new, c_new = pl.pallas_call(
        _lstm_kernel,
        out_shape=(jax.ShapeDtypeStruct((1, HG), jnp.float32),
                   jax.ShapeDtypeStruct((1, HG), jnp.float32)),
    )(xh, prep["wl"], c0p)

    hidden_out = (h_new[:, :H].reshape(1, 1, H), c_new[:, :H].reshape(1, 1, H))
    scores = scores_row[0, :N].reshape(N, 1, 1)
    return hidden_out, scores


# ----------------------------------------------------------------------------
# Deterministic parameter initialization (shapes from ArgPolicy.__init__)
# ----------------------------------------------------------------------------
def init_params(key, embedding_dim, hidden_dim):
    E, H = embedding_dim, hidden_dim
    ks = jax.random.split(key, 8)
    s_lstm = 1.0 / jnp.sqrt(H)
    s_fc1 = 1.0 / jnp.sqrt(E + 2 * H)
    s_fc2 = 1.0 / jnp.sqrt(E)
    u = lambda k, shape, s: jax.random.uniform(k, shape, jnp.float32, -s, s)
    return {
        "E": E, "H": H,
        # nn.LSTM(E, H): weight_ih (4H, E), weight_hh (4H, H), biases (4H,)
        "w_ih": u(ks[0], (4 * H, E), s_lstm),
        "w_hh": u(ks[1], (4 * H, H), s_lstm),
        "b_ih": u(ks[2], (4 * H,), s_lstm),
        "b_hh": u(ks[3], (4 * H,), s_lstm),
        # fc1: Linear(E + 2H, E);  fc2: Linear(E, 1)
        "fc1_w": u(ks[4], (E, E + 2 * H), s_fc1),
        "fc1_b": u(ks[5], (E,), s_fc1),
        "fc2_w": u(ks[6], (1, E), s_fc2),
        "fc2_b": u(ks[7], (1,), s_fc2),
    }


# Plain-JAX reference (mirrors the PyTorch module) for correctness checks.
def reference_forward(params, x, candidates, hidden):
    E, H = params["E"], params["H"]
    N = candidates.shape[0]
    cand = candidates.reshape(N, E + 2 * H)
    c1 = jax.nn.relu(cand @ params["fc1_w"].T + params["fc1_b"])
    c2 = jax.nn.relu(c1 @ params["fc2_w"].T + params["fc2_b"])
    scores = jax.nn.sigmoid(c2).reshape(N, 1, 1)
    x_row = x.reshape(1, E)
    h0 = hidden[0].reshape(1, H)
    c0 = hidden[1].reshape(1, H)
    gates = (x_row @ params["w_ih"].T + h0 @ params["w_hh"].T
             + params["b_ih"] + params["b_hh"])
    i_g = jax.nn.sigmoid(gates[:, 0 * H:1 * H])
    f_g = jax.nn.sigmoid(gates[:, 1 * H:2 * H])
    g_g = jnp.tanh(gates[:, 2 * H:3 * H])
    o_g = jax.nn.sigmoid(gates[:, 3 * H:4 * H])
    c_new = f_g * c0 + i_g * g_g
    h_new = o_g * jnp.tanh(c_new)
    return (h_new.reshape(1, 1, H), c_new.reshape(1, 1, H)), scores


if __name__ == "__main__":
    E, H = 32, 32
    key = jax.random.PRNGKey(0)
    kp, kx, kc_big, kc_small, kh, kcell = jax.random.split(key, 6)

    params = init_params(kp, E, H)
    prep = prepare_params(params)      # one-time weight prep (padded / bias-folded)

    x = jax.random.normal(kx, (E,), jnp.float32)
    h0 = jax.random.normal(kh, (1, 1, H), jnp.float32)
    c0 = jax.random.normal(kcell, (1, 1, H), jnp.float32)

    fwd = jax.jit(lambda xx, cc, hh: arg_policy_forward(prep, xx, cc, hh))

    # Two candidate counts: multi-tile grid path (N=1024 -> 2 x 512 tiles) and
    # the tiny exact-fit path (N=8 -> one (8, F) tile).
    for kc, N in ((kc_big, 1024), (kc_small, 8)):
        candidates = jax.random.normal(kc, (N, E + 2 * H), jnp.float32)
        (h_out, c_out), scores = fwd(x, candidates, (h0, c0))
        jax.block_until_ready((h_out, c_out, scores))

        (h_ref, c_ref), s_ref = reference_forward(params, x, candidates, (h0, c0))
        assert h_out.shape == (1, 1, H) and c_out.shape == (1, 1, H)
        assert scores.shape == (N, 1, 1)
        assert jnp.allclose(h_out, h_ref, atol=1e-4, rtol=1e-4)
        assert jnp.allclose(c_out, c_ref, atol=1e-4, rtol=1e-4)
        assert jnp.allclose(scores, s_ref, atol=1e-4, rtol=1e-4)

    print("KERNEL_OK")
</pallas_src>

<mosaic_0001>
module attributes {stable_mosaic.version = 11 : i64} {
  func.func @_lstm_kernel(%arg0: memref<1x128xf32, #tpu.memory_space<vmem>>, %arg1: memref<128x512xf32, #tpu.memory_space<vmem>>, %arg2: memref<1x128xf32, #tpu.memory_space<vmem>>, %arg3: memref<1x128xf32, #tpu.memory_space<vmem>>, %arg4: memref<1x128xf32, #tpu.memory_space<vmem>>) attributes {dimension_semantics = [], scalar_prefetch = 0 : i64, scratch_operands = 0 : i64, tpu.core_type = #tpu.core_type<tc>} {
    %c0 = arith.constant 0 : index
    %c0_0 = arith.constant 0 : index
    %0 = vector.load %arg0[%c0, %c0_0] : memref<1x128xf32, #tpu.memory_space<vmem>>, vector<1x128xf32>
    %c0_1 = arith.constant 0 : index
    %c0_2 = arith.constant 0 : index
    %1 = vector.load %arg1[%c0_1, %c0_2] : memref<128x512xf32, #tpu.memory_space<vmem>>, vector<128x512xf32>
    %cst = arith.constant dense<0.000000e+00> : vector<1x512xf32>
    %2 = tpu.matmul %0, %1, %cst {dimension_numbers = #tpu.dot_dimension_numbers<[1], [0], [0], [1], [0, 0, 1, 1], [], []>} : vector<1x128xf32>, vector<128x512xf32>, vector<1x512xf32> -> vector<1x512xf32>
    %3 = vector.extract_strided_slice %2 {offsets = [0, 0], sizes = [1, 128], strides = [1, 1]} : vector<1x512xf32> to vector<1x128xf32>
    %4 = arith.negf %3 : vector<1x128xf32>
    %5 = math.exp %4 : vector<1x128xf32>
    %cst_3 = arith.constant 1.000000e+00 : f32
    %6 = vector.broadcast %cst_3 : f32 to vector<1x128xf32>
    %7 = arith.addf %6, %5 : vector<1x128xf32>
    %8 = arith.divf %6, %7 : vector<1x128xf32>
    %9 = vector.extract_strided_slice %2 {offsets = [0, 128], sizes = [1, 128], strides = [1, 1]} : vector<1x512xf32> to vector<1x128xf32>
    %10 = arith.negf %9 : vector<1x128xf32>
    %11 = math.exp %10 : vector<1x128xf32>
    %cst_4 = arith.constant 1.000000e+00 : f32
    %12 = vector.broadcast %cst_4 : f32 to vector<1x128xf32>
    %13 = arith.addf %12, %11 : vector<1x128xf32>
    %14 = arith.divf %12, %13 : vector<1x128xf32>
    %15 = vector.extract_strided_slice %2 {offsets = [0, 256], sizes = [1, 128], strides = [1, 1]} : vector<1x512xf32> to vector<1x128xf32>
    %16 = math.tanh %15 : vector<1x128xf32>
    %17 = vector.extract_strided_slice %2 {offsets = [0, 384], sizes = [1, 128], strides = [1, 1]} : vector<1x512xf32> to vector<1x128xf32>
    %18 = arith.negf %17 : vector<1x128xf32>
    %19 = math.exp %18 : vector<1x128xf32>
    %cst_5 = arith.constant 1.000000e+00 : f32
    %20 = vector.broadcast %cst_5 : f32 to vector<1x128xf32>
    %21 = arith.addf %20, %19 : vector<1x128xf32>
    %22 = arith.divf %20, %21 : vector<1x128xf32>
    %c0_6 = arith.constant 0 : index
    %c0_7 = arith.constant 0 : index
    %23 = vector.load %arg2[%c0_6, %c0_7] : memref<1x128xf32, #tpu.memory_space<vmem>>, vector<1x128xf32>
    %24 = arith.mulf %14, %23 : vector<1x128xf32>
    %25 = arith.mulf %8, %16 : vector<1x128xf32>
    %26 = arith.addf %24, %25 : vector<1x128xf32>
    %27 = math.tanh %26 : vector<1x128xf32>
    %28 = arith.mulf %22, %27 : vector<1x128xf32>
    %c0_8 = arith.constant 0 : index
    %c0_9 = arith.constant 0 : index
    %29 = vector.load %arg3[%c0_8, %c0_9] : memref<1x128xf32, #tpu.memory_space<vmem>>, vector<1x128xf32>
    tpu.vector_store %arg3[%c0_8, %c0_9], %28 {strides = array<i32>} : memref<1x128xf32, #tpu.memory_space<vmem>>, vector<1x128xf32>,
    %c0_10 = arith.constant 0 : index
    %c0_11 = arith.constant 0 : index
    %30 = vector.load %arg4[%c0_10, %c0_11] : memref<1x128xf32, #tpu.memory_space<vmem>>, vector<1x128xf32>
    tpu.vector_store %arg4[%c0_10, %c0_11], %26 {strides = array<i32>} : memref<1x128xf32, #tpu.memory_space<vmem>>, vector<1x128xf32>,
    return
  }
}

module attributes {stable_mosaic.version = 11 : i64} {
  func.func @_score_kernel(%arg0: i32, %arg1: memref<512x96xf32, #tpu.memory_space<vmem>>, %arg2: memref<40x96xf32, #tpu.memory_space<vmem>>, %arg3: memref<40x1xf32, #tpu.memory_space<vmem>>, %arg4: memref<1x40xf32, #tpu.memory_space<vmem>>, %arg5: memref<1x512xf32, #tpu.memory_space<vmem>>) attributes {dimension_semantics = [#tpu.dimension_semantics<parallel>], iteration_bounds = array<i64: 2>, scalar_prefetch = 0 : i64, scratch_operands = 0 : i64, tpu.core_type = #tpu.core_type<tc>, window_params = [{transform_indices = @transform_0, window_bounds = array<i64: 512, 96>}, {pipeline_mode = #tpu.pipeline_mode<synchronous>, transform_indices = @transform_1, window_bounds = array<i64: 40, 96>}, {pipeline_mode = #tpu.pipeline_mode<synchronous>, transform_indices = @transform_2, window_bounds = array<i64: 40, 1>}, {pipeline_mode = #tpu.pipeline_mode<synchronous>, transform_indices = @transform_3, window_bounds = array<i64: 1, 40>}, {transform_indices = @transform_4, window_bounds = array<i64: 1, 512>}]} {
    %c0 = arith.constant 0 : index
    %c0_0 = arith.constant 0 : index
    %0 = vector.load %arg2[%c0, %c0_0] : memref<40x96xf32, #tpu.memory_space<vmem>>, vector<40x96xf32>
    %c0_1 = arith.constant 0 : index
    %c0_2 = arith.constant 0 : index
    %1 = vector.load %arg1[%c0_1, %c0_2] : memref<512x96xf32, #tpu.memory_space<vmem>>, vector<512x96xf32>
    %cst = arith.constant dense<0.000000e+00> : vector<40x512xf32>
    %2 = tpu.matmul %0, %1, %cst {dimension_numbers = #tpu.dot_dimension_numbers<[1], [1], [0], [0], [0, 0, 1, 0], [], []>} : vector<40x96xf32>, vector<512x96xf32>, vector<40x512xf32> -> vector<40x512xf32>
    %c0_3 = arith.constant 0 : index
    %c0_4 = arith.constant 0 : index
    %3 = vector.load %arg3[%c0_3, %c0_4] : memref<40x1xf32, #tpu.memory_space<vmem>>, vector<40x1xf32>
    %4 = vector.broadcast %3 : vector<40x1xf32> to vector<40x512xf32>
    %5 = arith.addf %2, %4 : vector<40x512xf32>
    %cst_5 = arith.constant 0.000000e+00 : f32
    %6 = vector.broadcast %cst_5 : f32 to vector<40x512xf32>
    %7 = arith.maximumf %5, %6 : vector<40x512xf32>
    %c0_6 = arith.constant 0 : index
    %c0_7 = arith.constant 0 : index
    %8 = vector.load %arg4[%c0_6, %c0_7] : memref<1x40xf32, #tpu.memory_space<vmem>>, vector<1x40xf32>
    %cst_8 = arith.constant dense<0.000000e+00> : vector<1x512xf32>
    %9 = tpu.matmul %8, %7, %cst_8 {dimension_numbers = #tpu.dot_dimension_numbers<[1], [0], [0], [1], [0, 0, 1, 1], [], []>} : vector<1x40xf32>, vector<40x512xf32>, vector<1x512xf32> -> vector<1x512xf32>
    %cst_9 = arith.constant 0.000000e+00 : f32
    %10 = vector.broadcast %cst_9 : f32 to vector<1x512xf32>
    %11 = arith.maximumf %9, %10 : vector<1x512xf32>
    %12 = arith.negf %11 : vector<1x512xf32>
    %13 = math.exp %12 : vector<1x512xf32>
    %cst_10 = arith.constant 1.000000e+00 : f32
    %14 = vector.broadcast %cst_10 : f32 to vector<1x512xf32>
    %15 = arith.addf %14, %13 : vector<1x512xf32>
    %16 = arith.divf %14, %15 : vector<1x512xf32>
    %c0_11 = arith.constant 0 : index
    %c0_12 = arith.constant 0 : index
    %17 = vector.load %arg5[%c0_11, %c0_12] : memref<1x512xf32, #tpu.memory_space<vmem>>, vector<1x512xf32>
    tpu.vector_store %arg5[%c0_11, %c0_12], %16 {strides = array<i32>} : memref<1x512xf32, #tpu.memory_space<vmem>>, vector<1x512xf32>,
    return
  }
  func.func @transform_0(%arg0: i32) -> (i32, i32) {
    %c0_i32 = arith.constant 0 : i32
    %c0_i32_0 = arith.constant 0 : i32
    return %arg0, %c0_i32 : i32, i32
  }
  func.func @transform_1(%arg0: i32) -> (i32, i32) {
    %c0_i32 = arith.constant 0 : i32
    %c0_i32_0 = arith.constant 0 : i32
    %c0_i32_1 = arith.constant 0 : i32
    return %c0_i32, %c0_i32_0 : i32, i32
  }
  func.func @transform_2(%arg0: i32) -> (i32, i32) {
    %c0_i32 = arith.constant 0 : i32
    %c0_i32_0 = arith.constant 0 : i32
    %c0_i32_1 = arith.constant 0 : i32
    return %c0_i32, %c0_i32_0 : i32, i32
  }
  func.func @transform_3(%arg0: i32) -> (i32, i32) {
    %c0_i32 = arith.constant 0 : i32
    %c0_i32_0 = arith.constant 0 : i32
    %c0_i32_1 = arith.constant 0 : i32
    return %c0_i32, %c0_i32_0 : i32, i32
  }
  func.func @transform_4(%arg0: i32) -> (i32, i32) {
    %c0_i32 = arith.constant 0 : i32
    %c0_i32_0 = arith.constant 0 : i32
    return %c0_i32, %arg0 : i32, i32
  }
}

</mosaic_0001>

<llo_original>
// kernel: _lambda_.3
$region0: #{_lambda_.3}
  #allocation0 [shape = 'u32[]', space=smem, size = 0x4, offset = 0x4, fixed_abs, tag = 'smem constant byte address 0x4 - core index']
  #allocation1 [shape = 'u32[144,128]{1,0:T(1,128)}', space=vmem, size = 0x12000, scoped, tag = 'internal scratch']
  %s0 = inlined_call_operand.vmem [shape: f32[1,128], index: 0, kind: input, shape index: {}]
  %s1 = inlined_call_operand.hbm [shape: f32[128,512], index: 1, kind: input, shape index: {}]
  %s2 = inlined_call_operand.vmem [shape: f32[1,128], index: 2, kind: input, shape index: {}]
  %s3 = inlined_call_operand.vmem [shape: f32[1,128], index: 3, kind: output, shape index: {0}]
  %s4 = inlined_call_operand.vmem [shape: f32[1,128], index: 4, kind: output, shape index: {1}]
  %5 = xla_tuple %s3, %s4
  %s6 = sld [smem:[#allocation0]]
  $region34: #{_lambda_.3} parent=0
    _
  %s8 = ssub.s32 1, %s6
  %s9 = scalar_select 0, %s8, %s6
  $region1: #{_lambda_.3} parent=0
    #allocation2 [shape = 'u8[262144]{0}', space=vmem, size = 0x40000, scoped, tag = 'input window, operand 1, single buffered']
    #allocation3 [shape = 's32[1]{0}', space=sflag, size = 0x4, scoped, tag = 'scoped memory for _lambda_.3']
    %10 = vsyncpa [#allocation3], 0
    // Predicated region
    $region2: #{_lambda_.3} parent=1 // pred_check
      _
    $region3: #{_lambda_.3} parent=1 // pred_check_branch
      %12 = sbr.rel (0) target = $region5
    $region4: #{_lambda_.3} parent=1 // pred_region
      _
    $region5: #{_lambda_.3} parent=1 // pred_fallthru
      _
    // Predicated region
    $region6: #{_lambda_.3} parent=1 // pred_check
      _
    $region7: #{_lambda_.3} parent=1 // pred_check_branch
      %14 = sbr.rel (0) target = $region9
    $region8: #{_lambda_.3} parent=1 // pred_region
      %s16 = ssub.s32 8192, 8192
      %17 = vsyncadd [#allocation3], %s16
      %s18 = sshll.u32 [#allocation2], 4
      %s19 = int_to_ptr.vmem [resolvable:$true] %s18
      %24 = dma.hbm_to_vmem [thread:$0]  %s1, 8192, %s19, [#allocation3], 512, 512, 32
    $region9: #{_lambda_.3} parent=1 // pred_fallthru
      _
    // Predicated region
    $region10: #{_lambda_.3} parent=1 // pred_check
      _
    $region11: #{_lambda_.3} parent=1 // pred_check_branch
      %26 = sbr.rel (0) target = $region13
    $region12: #{_lambda_.3} parent=1 // pred_region
      _
    $region13: #{_lambda_.3} parent=1 // pred_fallthru
      _
    // Predicated region
    $region14: #{_lambda_.3} parent=1 // pred_check
      _
    $region15: #{_lambda_.3} parent=1 // pred_check_branch
      %28 = sbr.rel (0) target = $region17
    $region16: #{_lambda_.3} parent=1 // pred_region
      %29 = dma.done [#allocation3], 8192
    $region17: #{_lambda_.3} parent=1 // pred_fallthru
      _
    %v30 = vld [vmem:[%s0] sm:$0x1]
    %v31 = vld [vmem:[#allocation2] sm:$0xff]
    %v32 = vld [vmem:[#allocation2 + $0x8] sm:$0xff]
    %v33 = vld [vmem:[#allocation2 + $0x10] sm:$0xff]
    %v34 = vld [vmem:[#allocation2 + $0x18] sm:$0xff]
    %v35 = vld [vmem:[#allocation2 + $0x20] sm:$0xff]
    %v36 = vld [vmem:[#allocation2 + $0x28] sm:$0xff]
    %v37 = vld [vmem:[#allocation2 + $0x30] sm:$0xff]
    %v38 = vld [vmem:[#allocation2 + $0x38] sm:$0xff]
    %v39 = vld [vmem:[#allocation2 + $0x40] sm:$0xff]
    %v40 = vld [vmem:[#allocation2 + $0x48] sm:$0xff]
    %v41 = vld [vmem:[#allocation2 + $0x50] sm:$0xff]
    %v42 = vld [vmem:[#allocation2 + $0x58] sm:$0xff]
    %v43 = vld [vmem:[#allocation2 + $0x60] sm:$0xff]
    %v44 = vld [vmem:[#allocation2 + $0x68] sm:$0xff]
    %v45 = vld [vmem:[#allocation2 + $0x70] sm:$0xff]
    %v46 = vld [vmem:[#allocation2 + $0x78] sm:$0xff]
    %v47 = vld [vmem:[#allocation2 + $0x80] sm:$0xff]
    %v48 = vld [vmem:[#allocation2 + $0x88] sm:$0xff]
    %v49 = vld [vmem:[#allocation2 + $0x90] sm:$0xff]
    %v50 = vld [vmem:[#allocation2 + $0x98] sm:$0xff]
    %v51 = vld [vmem:[#allocation2 + $0xa0] sm:$0xff]
    %v52 = vld [vmem:[#allocation2 + $0xa8] sm:$0xff]
    %v53 = vld [vmem:[#allocation2 + $0xb0] sm:$0xff]
    %v54 = vld [vmem:[#allocation2 + $0xb8] sm:$0xff]
    %v55 = vld [vmem:[#allocation2 + $0xc0] sm:$0xff]
    %v56 = vld [vmem:[#allocation2 + $0xc8] sm:$0xff]
    %v57 = vld [vmem:[#allocation2 + $0xd0] sm:$0xff]
    %v58 = vld [vmem:[#allocation2 + $0xd8] sm:$0xff]
    %v59 = vld [vmem:[#allocation2 + $0xe0] sm:$0xff]
    %v60 = vld [vmem:[#allocation2 + $0xe8] sm:$0xff]
    %v61 = vld [vmem:[#allocation2 + $0xf0] sm:$0xff]
    %v62 = vld [vmem:[#allocation2 + $0xf8] sm:$0xff]
    %v63 = vld [vmem:[#allocation2 + $0x100] sm:$0xff]
    %v64 = vld [vmem:[#allocation2 + $0x108] sm:$0xff]
    %v65 = vld [vmem:[#allocation2 + $0x110] sm:$0xff]
    %v66 = vld [vmem:[#allocation2 + $0x118] sm:$0xff]
    %v67 = vld [vmem:[#allocation2 + $0x120] sm:$0xff]
    %v68 = vld [vmem:[#allocation2 + $0x128] sm:$0xff]
    %v69 = vld [vmem:[#allocation2 + $0x130] sm:$0xff]
    %v70 = vld [vmem:[#allocation2 + $0x138] sm:$0xff]
    %v71 = vld [vmem:[#allocation2 + $0x140] sm:$0xff]
    %v72 = vld [vmem:[#allocation2 + $0x148] sm:$0xff]
    %v73 = vld [vmem:[#allocation2 + $0x150] sm:$0xff]
    %v74 = vld [vmem:[#allocation2 + $0x158] sm:$0xff]
    %v75 = vld [vmem:[#allocation2 + $0x160] sm:$0xff]
    %v76 = vld [vmem:[#allocation2 + $0x168] sm:$0xff]
    %v77 = vld [vmem:[#allocation2 + $0x170] sm:$0xff]
    %v78 = vld [vmem:[#allocation2 + $0x178] sm:$0xff]
    %v79 = vld [vmem:[#allocation2 + $0x180] sm:$0xff]
    %v80 = vld [vmem:[#allocation2 + $0x188] sm:$0xff]
    %v81 = vld [vmem:[#allocation2 + $0x190] sm:$0xff]
    %v82 = vld [vmem:[#allocation2 + $0x198] sm:$0xff]
    %v83 = vld [vmem:[#allocation2 + $0x1a0] sm:$0xff]
    %v84 = vld [vmem:[#allocation2 + $0x1a8] sm:$0xff]
    %v85 = vld [vmem:[#allocation2 + $0x1b0] sm:$0xff]
    %v86 = vld [vmem:[#allocation2 + $0x1b8] sm:$0xff]
    %v87 = vld [vmem:[#allocation2 + $0x1c0] sm:$0xff]
    %v88 = vld [vmem:[#allocation2 + $0x1c8] sm:$0xff]
    %v89 = vld [vmem:[#allocation2 + $0x1d0] sm:$0xff]
    %v90 = vld [vmem:[#allocation2 + $0x1d8] sm:$0xff]
    %v91 = vld [vmem:[#allocation2 + $0x1e0] sm:$0xff]
    %v92 = vld [vmem:[#allocation2 + $0x1e8] sm:$0xff]
    %v93 = vld [vmem:[#allocation2 + $0x1f0] sm:$0xff]
    %v94 = vld [vmem:[#allocation2 + $0x1f8] sm:$0xff]
    %95 = vmatprep.subr.mxu0 %v32
    %96 = vmatpush1.msra.mxu0 %v31
    %97 = vmatprep.subr.mxu0 %v36
    %98 = vmatpush1.msra.mxu0 %v35
    %99 = vmatprep.subr.mxu0 %v40
    %100 = vmatpush1.msra.mxu0 %v39
    %101 = vmatprep.subr.mxu0 %v44
    %102 = vmatpush1.msra.mxu0 %v43
    %103 = vmatprep.subr.mxu0 %v48
    %104 = vmatpush1.msra.mxu0 %v47
    %105 = vmatprep.subr.mxu0 %v52
    %106 = vmatpush1.msra.mxu0 %v51
    %107 = vmatprep.subr.mxu0 %v56
    %108 = vmatpush1.msra.mxu0 %v55
    %109 = vmatprep.subr.mxu0 %v60
    %110 = vmatpush1.msra.mxu0 %v59
    %111 = vmatprep.subr.mxu0 %v64
    %112 = vmatpush1.msra.mxu0 %v63
    %113 = vmatprep.subr.mxu0 %v68
    %114 = vmatpush1.msra.mxu0 %v67
    %115 = vmatprep.subr.mxu0 %v72
    %116 = vmatpush1.msra.mxu0 %v71
    %117 = vmatprep.subr.mxu0 %v76
    %118 = vmatpush1.msra.mxu0 %v75
    %119 = vmatprep.subr.mxu0 %v80
    %120 = vmatpush1.msra.mxu0 %v79
    %121 = vmatprep.subr.mxu0 %v84
    %122 = vmatpush1.msra.mxu0 %v83
    %123 = vmatprep.subr.mxu0 %v88
    %124 = vmatpush1.msra.mxu0 %v87
    %125 = vmatprep.subr.mxu0 %v92
    %126 = vmatpush1.msra.mxu0 %v91
    %127 = vmatprep.subr.mxu0 0.0
    %128 = vmatpush1.msra.mxu0 0.0
    %129 = vmatprep.subr.mxu0 0.0
    %130 = vmatpush1.msra.mxu0 0.0
    %131 = vmatprep.subr.mxu0 0.0
    %132 = vmatpush1.msra.mxu0 0.0
    %133 = vmatprep.subr.mxu0 0.0
    %134 = vmatpush1.msra.mxu0 0.0
    %135 = vmatprep.subr.mxu0 0.0
    %136 = vmatpush1.msra.mxu0 0.0
    %137 = vmatprep.subr.mxu0 0.0
    %138 = vmatpush1.msra.mxu0 0.0
    %139 = vmatprep.subr.mxu0 0.0
    %140 = vmatpush1.msra.mxu0 0.0
    %141 = vmatprep.subr.mxu0 0.0
    %142 = vmatpush1.msra.mxu0 0.0
    %143 = vmatprep.subr.mxu0 0.0
    %144 = vmatpush1.msra.mxu0 0.0
    %145 = vmatprep.subr.mxu0 0.0
    %146 = vmatpush1.msra.mxu0 0.0
    %147 = vmatprep.subr.mxu0 0.0
    %148 = vmatpush1.msra.mxu0 0.0
    %149 = vmatprep.subr.mxu0 0.0
    %150 = vmatpush1.msra.mxu0 0.0
    %151 = vmatprep.subr.mxu0 0.0
    %152 = vmatpush1.msra.mxu0 0.0
    %153 = vmatprep.subr.mxu0 0.0
    %154 = vmatpush1.msra.mxu0 0.0
    %155 = vmatprep.subr.mxu0 0.0
    %156 = vmatpush1.msra.mxu0 0.0
    %157 = vmatprep.subr.mxu0 0.0
    %158 = vmatpush1.msra.mxu0 0.0
    %159 = vmatprep.mubr.f32.mxu0 0.0
    %160 = vmatmul.mubr.f32.gmra.mrb[0].mxu0 %v30
    %v161 = vpop.f32.mrb[0].mxu0
    %v162 = vadd.f32 0.0, %v161
    %v163 = vpop.f32.mrb[0].mxu0
    %v164 = vadd.f32 0.0, %v163
    %165 = vdwg.mxu0
    %166 = vmatprep.subr.mxu0 %v34
    %167 = vmatpush1.msra.mxu0 %v33
    %168 = vmatprep.subr.mxu0 %v38
    %169 = vmatpush1.msra.mxu0 %v37
    %170 = vmatprep.subr.mxu0 %v42
    %171 = vmatpush1.msra.mxu0 %v41
    %172 = vmatprep.subr.mxu0 %v46
    %173 = vmatpush1.msra.mxu0 %v45
    %174 = vmatprep.subr.mxu0 %v50
    %175 = vmatpush1.msra.mxu0 %v49
    %176 = vmatprep.subr.mxu0 %v54
    %177 = vmatpush1.msra.mxu0 %v53
    %178 = vmatprep.subr.mxu0 %v58
    %179 = vmatpush1.msra.mxu0 %v57
    %180 = vmatprep.subr.mxu0 %v62
    %181 = vmatpush1.msra.mxu0 %v61
    %182 = vmatprep.subr.mxu0 %v66
    %183 = vmatpush1.msra.mxu0 %v65
    %184 = vmatprep.subr.mxu0 %v70
    %185 = vmatpush1.msra.mxu0 %v69
    %186 = vmatprep.subr.mxu0 %v74
    %187 = vmatpush1.msra.mxu0 %v73
    %188 = vmatprep.subr.mxu0 %v78
    %189 = vmatpush1.msra.mxu0 %v77
    %190 = vmatprep.subr.mxu0 %v82
    %191 = vmatpush1.msra.mxu0 %v81
    %192 = vmatprep.subr.mxu0 %v86
    %193 = vmatpush1.msra.mxu0 %v85
    %194 = vmatprep.subr.mxu0 %v90
    %195 = vmatpush1.msra.mxu0 %v89
    %196 = vmatprep.subr.mxu0 %v94
    %197 = vmatpush1.msra.mxu0 %v93
    %198 = vmatprep.subr.mxu0 0.0
    %199 = vmatpush1.msra.mxu0 0.0
    %200 = vmatprep.subr.mxu0 0.0
    %201 = vmatpush1.msra.mxu0 0.0
    %202 = vmatprep.subr.mxu0 0.0
    %203 = vmatpush1.msra.mxu0 0.0
    %204 = vmatprep.subr.mxu0 0.0
    %205 = vmatpush1.msra.mxu0 0.0
    %206 = vmatprep.subr.mxu0 0.0
    %207 = vmatpush1.msra.mxu0 0.0
    %208 = vmatprep.subr.mxu0 0.0
    %209 = vmatpush1.msra.mxu0 0.0
    %210 = vmatprep.subr.mxu0 0.0
    %211 = vmatpush1.msra.mxu0 0.0
    %212 = vmatprep.subr.mxu0 0.0
    %213 = vmatpush1.msra.mxu0 0.0
    %214 = vmatprep.subr.mxu0 0.0
    %215 = vmatpush1.msra.mxu0 0.0
    %216 = vmatprep.subr.mxu0 0.0
    %217 = vmatpush1.msra.mxu0 0.0
    %218 = vmatprep.subr.mxu0 0.0
    %219 = vmatpush1.msra.mxu0 0.0
    %220 = vmatprep.subr.mxu0 0.0
    %221 = vmatpush1.msra.mxu0 0.0
    %222 = vmatprep.subr.mxu0 0.0
    %223 = vmatpush1.msra.mxu0 0.0
    %224 = vmatprep.subr.mxu0 0.0
    %225 = vmatpush1.msra.mxu0 0.0
    %226 = vmatprep.subr.mxu0 0.0
    %227 = vmatpush1.msra.mxu0 0.0
    %228 = vmatprep.subr.mxu0 0.0
    %229 = vmatpush1.msra.mxu0 0.0
    %230 = vmatprep.mubr.f32.mxu0 0.0
    %231 = vmatmul.mubr.f32.gmra.mrb[0].mxu0 %v30
    %v232 = vpop.f32.mrb[0].mxu0
    %v233 = vadd.f32 0.0, %v232
    %v234 = vpop.f32.mrb[0].mxu0
    %v235 = vadd.f32 0.0, %v234
    %236 = vdwg.mxu0
    %v237 = vxor.u32 %v162, 2147483648
    %v238 = vmul.f32 %v237, 1.442695
    %v239 = vpow.pop %v238
    %v240 = vadd.f32 %v239, 1.0
    %v241 = vrcp.pop %v240
    %v242 = vmul.f32 1.0, %v241
    %v243 = vxor.u32 %v164, 2147483648
    %v244 = vmul.f32 %v243, 1.442695
    %v245 = vpow.pop %v244
    %v246 = vadd.f32 %v245, 1.0
    %v247 = vrcp.pop %v246
    %v248 = vmul.f32 1.0, %v247
    %v249 = vtanh.pop %v233
    %v250 = vxor.u32 %v235, 2147483648
    %v251 = vmul.f32 %v250, 1.442695
    %v252 = vpow.pop %v251
    %v253 = vadd.f32 %v252, 1.0
    %v254 = vrcp.pop %v253
    %v255 = vmul.f32 1.0, %v254
    %v256 = vld [vmem:[%s2] sm:$0x1]
    %v257 = vmul.f32 %v248, %v256
    %v258 = vmul.f32 %v242, %v249
    %v259 = vadd.f32 %v257, %v258
    %v260 = vtanh.pop %v259
    %v261 = vmul.f32 %v255, %v260
    %262 = vst [vmem:[%s3] sm:$0x1] %v261
    %263 = vst [vmem:[%s4] sm:$0x1] %v259
    // Predicated region
    $region18: #{_lambda_.3} parent=1 // pred_check
      _
    $region19: #{_lambda_.3} parent=1 // pred_check_branch
      %265 = sbr.rel (0) target = $region21
    $region20: #{_lambda_.3} parent=1 // pred_region
      _
    $region21: #{_lambda_.3} parent=1 // pred_fallthru
      _
    // Predicated region
    $region22: #{_lambda_.3} parent=1 // pred_check
      _
    $region23: #{_lambda_.3} parent=1 // pred_check_branch
      %267 = sbr.rel (0) target = $region25
    $region24: #{_lambda_.3} parent=1 // pred_region
      _
    $region25: #{_lambda_.3} parent=1 // pred_fallthru
      _
    // Predicated region
    $region26: #{_lambda_.3} parent=1 // pred_check
      _
    $region27: #{_lambda_.3} parent=1 // pred_check_branch
      %269 = sbr.rel (0) target = $region29
    $region28: #{_lambda_.3} parent=1 // pred_region
      _
    $region29: #{_lambda_.3} parent=1 // pred_fallthru
      _
    // Predicated region
    $region30: #{_lambda_.3} parent=1 // pred_check
      _
    $region31: #{_lambda_.3} parent=1 // pred_check_branch
      %271 = sbr.rel (0) target = $region33
    $region32: #{_lambda_.3} parent=1 // pred_region
      _
    $region33: #{_lambda_.3} parent=1 // pred_fallthru
      _
    %272 = vsyncpa [#allocation3], 1

// kernel: _lambda_.2
$region0: #{_lambda_.2}
  #allocation0 [shape = 'u32[]', space=smem, size = 0x4, offset = 0x4, fixed_abs, tag = 'smem constant byte address 0x4 - core index']
  #allocation1 [shape = 'u32[144,128]{1,0:T(1,128)}', space=vmem, size = 0x12000, scoped, tag = 'internal scratch']
  %s0 = inlined_call_operand.vmem [shape: f32[1024,96], index: 0, kind: input, shape index: {}]
  %s1 = inlined_call_operand.vmem [shape: f32[40,96], index: 1, kind: input, shape index: {}]
  %s2 = inlined_call_operand.vmem [shape: f32[40,1], index: 2, kind: input, shape index: {}]
  %s3 = inlined_call_operand.vmem [shape: f32[1,40], index: 3, kind: input, shape index: {}]
  %s4 = inlined_call_operand.hbm [shape: f32[1,1024], index: 4, kind: output, shape index: {}]
  %s5 = sld [smem:[#allocation0]]
  $region49: #{_lambda_.2} parent=0
    _
  %s7 = ssub.s32 1, %s5
  %s8 = scalar_select 0, %s7, %s5
  $region1: #{_lambda_.2} parent=0
    #allocation2 [shape = 'u8[4096]{0}', space=vmem, size = 0x1000, scoped, tag = 'output window, operand 0']
    #allocation3 [shape = 's32[2]{0}', space=sflag, size = 0x8, scoped, tag = 'scoped memory for _lambda_.2']
    %9 = vsyncpa [#allocation3], 0
    %s10 = scalar_lea.sflag [#allocation3], 1
    %11 = vsyncpa %s10, 0
    loop: start=0, step=1, limit=4
    $region2: #{_lambda_.2} parent=1 // loop_pre_header
      _
    $region3: #{_lambda_.2} parent=1 // loop_header
      %s13 = sphi 0, %s17
      %p14 = scmp.ge.s32.totalorder %s13, 4
      %s23 = sphi 0, %s25
      %s26 = sphi 0, %s23
      %s27 = sphi 0, %s26
      %s43 = sphi 0, %s27
      %s47 = sphi 0, %s47
      %s49 = sphi 0, %s47
      %s50 = sphi 0, %s49
      %s64 = sphi 0, %s50
      %s68 = sphi 0, %s68
      %s70 = sphi 0, %s68
      %s71 = sphi 0, %s70
      %s85 = sphi 0, %s71
      %s89 = sphi 0, %s89
      %s91 = sphi 0, %s89
      %s92 = sphi 0, %s91
      %s106 = sphi 0, %s92
      %s112 = sphi 0, %s114
      %s115 = sphi 0, %s112
      %s116 = sphi 0, %s115
      %s132 = sphi 0, %s116
    $region4: #{_lambda_.2} parent=1 // loop_header_branch
      %16 = sbr.rel (%p14) target = $region8
    $region5: #{_lambda_.2} parent=1 // loop_body
      %s18 = ssub.s32 %s13, 1
      %s19 = ssub.s32 %s13, 2
      %s20 = sadd.s32 %s13, 1
      %s21 = ssub.s32 %s13, %s20
      %p22 = scmp.eq.s32.totalorder %s21, 0
      %s24 = sadd.s32 %s23, 1
      %s25 = scalar_select %p22, %s23, %s24
      %p28 = pneg %p22
      %p29 = scmp.eq.s32.totalorder %s13, 1
      %p30 = por %p28, %p29
      %p31 = scmp.ne.s32.totalorder %s23, %s26
      %p32 = scmp.eq.s32.totalorder %s13, 0
      %p33 = por %p31, %p32
      %p34 = scmp.ne.s32.totalorder %s23, %s26
      %p35 = scmp.eq.s32.totalorder %s18, 1
      %p36 = por %p34, %p35
      %p37 = scmp.ne.s32.totalorder %s26, %s27
      %p38 = scmp.eq.s32.totalorder %s18, 0
      %p39 = por %p37, %p38
      %p40 = scmp.ne.s32.totalorder %s26, %s27
      %p41 = scmp.eq.s32.totalorder %s19, 1
      %p42 = por %p40, %p41
      %p44 = scmp.ne.s32.totalorder %s27, %s43
      %p45 = scmp.eq.s32.totalorder %s19, 0
      %p46 = por %p44, %p45
      %s48 = sadd.s32 %s47, 1
      %p51 = scmp.eq.s32.totalorder %s13, 1
      %p52 = scmp.ne.s32.totalorder %s47, %s49
      %p53 = scmp.eq.s32.totalorder %s13, 0
      %p54 = por %p52, %p53
      %p55 = scmp.ne.s32.totalorder %s47, %s49
      %p56 = scmp.eq.s32.totalorder %s18, 1
      %p57 = por %p55, %p56
      %p58 = scmp.ne.s32.totalorder %s49, %s50
      %p59 = scmp.eq.s32.totalorder %s18, 0
      %p60 = por %p58, %p59
      %p61 = scmp.ne.s32.totalorder %s49, %s50
      %p62 = scmp.eq.s32.totalorder %s19, 1
      %p63 = por %p61, %p62
      %p65 = scmp.ne.s32.totalorder %s50, %s64
      %p66 = scmp.eq.s32.totalorder %s19, 0
      %p67 = por %p65, %p66
      %s69 = sadd.s32 %s68, 1
      %p72 = scmp.eq.s32.totalorder %s13, 1
      %p73 = scmp.ne.s32.totalorder %s68, %s70
      %p74 = scmp.eq.s32.totalorder %s13, 0
      %p75 = por %p73, %p74
      %p76 = scmp.ne.s32.totalorder %s68, %s70
      %p77 = scmp.eq.s32.totalorder %s18, 1
      %p78 = por %p76, %p77
      %p79 = scmp.ne.s32.totalorder %s70, %s71
      %p80 = scmp.eq.s32.totalorder %s18, 0
      %p81 = por %p79, %p80
      %p82 = scmp.ne.s32.totalorder %s70, %s71
      %p83 = scmp.eq.s32.totalorder %s19, 1
      %p84 = por %p82, %p83
      %p86 = scmp.ne.s32.totalorder %s71, %s85
      %p87 = scmp.eq.s32.totalorder %s19, 0
      %p88 = por %p86, %p87
      %s90 = sadd.s32 %s89, 1
      %p93 = scmp.eq.s32.totalorder %s13, 1
      %p94 = scmp.ne.s32.totalorder %s89, %s91
      %p95 = scmp.eq.s32.totalorder %s13, 0
      %p96 = por %p94, %p95
      %p97 = scmp.ne.s32.totalorder %s89, %s91
      %p98 = scmp.eq.s32.totalorder %s18, 1
      %p99 = por %p97, %p98
      %p100 = scmp.ne.s32.totalorder %s91, %s92
      %p101 = scmp.eq.s32.totalorder %s18, 0
      %p102 = por %p100, %p101
      %p103 = scmp.ne.s32.totalorder %s91, %s92
      %p104 = scmp.eq.s32.totalorder %s19, 1
      %p105 = por %p103, %p104
      %p107 = scmp.ne.s32.totalorder %s92, %s106
      %p108 = scmp.eq.s32.totalorder %s19, 0
      %p109 = por %p107, %p108
      %s110 = ssub.s32 %s13, %s20
      %p111 = scmp.eq.s32.totalorder %s110, 0
      %s113 = sadd.s32 %s112, 1
      %s114 = scalar_select %p111, %s112, %s113
      %p117 = pneg %p111
      %p118 = scmp.eq.s32.totalorder %s13, 1
      %p119 = por %p117, %p118
      %p120 = scmp.ne.s32.totalorder %s112, %s115
      %p121 = scmp.eq.s32.totalorder %s13, 0
      %p122 = por %p120, %p121
      %p123 = scmp.ne.s32.totalorder %s112, %s115
      %p124 = scmp.eq.s32.totalorder %s18, 1
      %p125 = por %p123, %p124
      %p126 = scmp.ne.s32.totalorder %s115, %s116
      %p127 = scmp.eq.s32.totalorder %s18, 0
      %p128 = por %p126, %p127
      %p129 = scmp.ne.s32.totalorder %s115, %s116
      %p130 = scmp.eq.s32.totalorder %s19, 1
      %p131 = por %p129, %p130
      %p133 = scmp.ne.s32.totalorder %s116, %s132
      %p134 = scmp.eq.s32.totalorder %s19, 0
      %p135 = por %p133, %p134
      %p136 = scmp.le.s32.totalorder 1, %s13
      %p137 = scmp.lt.s32.totalorder %s13, 3
      %p138 = pnand %p136, %p137
      %p139 = pneg %p138
      // Predicated region
      $region9: #{_lambda_.2} parent=5 // pred_check
        _
      $region10: #{_lambda_.2} parent=5 // pred_check_branch
        %141 = sbr.rel (%p138) target = $region12
      $region11: #{_lambda_.2} parent=5 // pred_region
        %s142 = ssub.s32 %s13, 1
        // Predicated region
        $region13: #{_lambda_.2} parent=11 // pred_check
          %p143 = pneg %p60
        $region14: #{_lambda_.2} parent=11 // pred_check_branch
          %145 = sbr.rel (%p143) target = $region16
        $region15: #{_lambda_.2} parent=11 // pred_region
          _
        $region16: #{_lambda_.2} parent=11 // pred_fallthru
          _
        // Predicated region
        $region17: #{_lambda_.2} parent=11 // pred_check
          %p146 = pneg %p81
        $region18: #{_lambda_.2} parent=11 // pred_check_branch
          %148 = sbr.rel (%p146) target = $region20
        $region19: #{_lambda_.2} parent=11 // pred_region
          _
        $region20: #{_lambda_.2} parent=11 // pred_fallthru
          _
        // Predicated region
        $region21: #{_lambda_.2} parent=11 // pred_check
          %p149 = pneg %p102
        $region22: #{_lambda_.2} parent=11 // pred_check_branch
          %151 = sbr.rel (%p149) target = $region24
        $region23: #{_lambda_.2} parent=11 // pred_region
          _
        $region24: #{_lambda_.2} parent=11 // pred_fallthru
          _
      $region12: #{_lambda_.2} parent=5 // pred_fallthru
        _
      %p152 = scmp.lt.s32.totalorder %s13, 2
      // Predicated region
      $region25: #{_lambda_.2} parent=5 // pred_check
        %p153 = pneg %p152
      $region26: #{_lambda_.2} parent=5 // pred_check_branch
        %155 = sbr.rel (%p153) target = $region28
      $region27: #{_lambda_.2} parent=5 // pred_region
        // Predicated region
        $region29: #{_lambda_.2} parent=27 // pred_check
          %p156 = pneg %p33
        $region30: #{_lambda_.2} parent=27 // pred_check_branch
          %158 = sbr.rel (%p156) target = $region32
        $region31: #{_lambda_.2} parent=27 // pred_region
          %s159 = smul.u32 64, %s13
          %p160 = scmp.lt.s32.totalorder %s159, 127
          %s161 = scalar_select %p160, %s159, 127
          %s162 = smul.addr %s161, 8
          %s163 = scalar_lea.vmem %s0, %s162
          %s164 = smul.u32 64, %s13
        $region32: #{_lambda_.2} parent=27 // pred_fallthru
          _
      $region28: #{_lambda_.2} parent=5 // pred_fallthru
        _
      %p165 = scmp.le.s32.totalorder 1, %s13
      %p166 = scmp.lt.s32.totalorder %s13, 3
      %p167 = pnand %p165, %p166
      %p168 = pneg %p167
      // Predicated region
      $region33: #{_lambda_.2} parent=5 // pred_check
        _
      $region34: #{_lambda_.2} parent=5 // pred_check_branch
        %170 = sbr.rel (%p167) target = $region36
      $region35: #{_lambda_.2} parent=5 // pred_region
        %s171 = ssub.s32 %s13, 1
        %s172 = smul.u32 64, %s18
        %p173 = scmp.lt.s32.totalorder %s172, 127
        %s174 = scalar_select %p173, %s172, 127
        %s175 = smul.addr %s174, 8
        %s176 = scalar_lea.vmem %s0, %s175
        %p177 = pneg %p39
        %p178 = pneg %p36
        %p179 = pneg %p60
        %p180 = pneg %p57
        %p181 = pneg %p81
        %p182 = pneg %p78
        %p183 = pneg %p102
        %p184 = pneg %p99
        %p185 = pneg %p128
        %p186 = pneg %p125
        %s187 = sand.u32 %s115, 1
        %s188 = scalar_lea.sflag [#allocation3], %s187
        %s189 = sand.u32 %s115, 1
        %s190 = smul.addr %s189, 4
        %s191 = scalar_lea.vmem [#allocation2], %s190
        %s192 = smul.u32 64, %s18
        %p193 = scmp.lt.s32.totalorder %s192, 127
        %s194 = scalar_select %p193, %s192, 127
        %s195 = smul.addr %s194, 8
        %s196 = scalar_lea.vmem %s0, %s195
        %s197 = smul.u32 64, %s18
        %s198 = smul.u32 4, %s18
        %v199 = vld [vmem:[%s1] sm:$0xff]
        %v200 = vld [vmem:[%s1 + $0x8] sm:$0xff]
        %v201 = vld [vmem:[%s1 + $0x10] sm:$0xff]
        %v202 = vld [vmem:[%s1 + $0x18] sm:$0xff]
        %v203 = vld [vmem:[%s1 + $0x20] sm:$0xff]
        %v204 = vld [vmem:[%s196] sm:$0xff]
        %v205 = vld [vmem:[%s196 + $0x8] sm:$0xff]
        %v206 = vld [vmem:[%s196 + $0x10] sm:$0xff]
        %v207 = vld [vmem:[%s196 + $0x18] sm:$0xff]
        %v208 = vld [vmem:[%s196 + $0x20] sm:$0xff]
        %v209 = vld [vmem:[%s196 + $0x28] sm:$0xff]
        %v210 = vld [vmem:[%s196 + $0x30] sm:$0xff]
        %v211 = vld [vmem:[%s196 + $0x38] sm:$0xff]
        %v212 = vld [vmem:[%s196 + $0x40] sm:$0xff]
        %v213 = vld [vmem:[%s196 + $0x48] sm:$0xff]
        %v214 = vld [vmem:[%s196 + $0x50] sm:$0xff]
        %v215 = vld [vmem:[%s196 + $0x58] sm:$0xff]
        %v216 = vld [vmem:[%s196 + $0x60] sm:$0xff]
        %v217 = vld [vmem:[%s196 + $0x68] sm:$0xff]
        %v218 = vld [vmem:[%s196 + $0x70] sm:$0xff]
        %v219 = vld [vmem:[%s196 + $0x78] sm:$0xff]
        %v220 = vld [vmem:[%s196 + $0x80] sm:$0xff]
        %v221 = vld [vmem:[%s196 + $0x88] sm:$0xff]
        %v222 = vld [vmem:[%s196 + $0x90] sm:$0xff]
        %v223 = vld [vmem:[%s196 + $0x98] sm:$0xff]
        %v224 = vld [vmem:[%s196 + $0xa0] sm:$0xff]
        %v225 = vld [vmem:[%s196 + $0xa8] sm:$0xff]
        %v226 = vld [vmem:[%s196 + $0xb0] sm:$0xff]
        %v227 = vld [vmem:[%s196 + $0xb8] sm:$0xff]
        %v228 = vld [vmem:[%s196 + $0xc0] sm:$0xff]
        %v229 = vld [vmem:[%s196 + $0xc8] sm:$0xff]
        %v230 = vld [vmem:[%s196 + $0xd0] sm:$0xff]
        %v231 = vld [vmem:[%s196 + $0xd8] sm:$0xff]
        %v232 = vld [vmem:[%s196 + $0xe0] sm:$0xff]
        %v233 = vld [vmem:[%s196 + $0xe8] sm:$0xff]
        %v234 = vld [vmem:[%s196 + $0xf0] sm:$0xff]
        %v235 = vld [vmem:[%s196 + $0xf8] sm:$0xff]
        %v236 = vld [vmem:[%s196 + $0x100] sm:$0xff]
        %v237 = vld [vmem:[%s196 + $0x108] sm:$0xff]
        %v238 = vld [vmem:[%s196 + $0x110] sm:$0xff]
        %v239 = vld [vmem:[%s196 + $0x118] sm:$0xff]
        %v240 = vld [vmem:[%s196 + $0x120] sm:$0xff]
        %v241 = vld [vmem:[%s196 + $0x128] sm:$0xff]
        %v242 = vld [vmem:[%s196 + $0x130] sm:$0xff]
        %v243 = vld [vmem:[%s196 + $0x138] sm:$0xff]
        %v244 = vld [vmem:[%s196 + $0x140] sm:$0xff]
        %v245 = vld [vmem:[%s196 + $0x148] sm:$0xff]
        %v246 = vld [vmem:[%s196 + $0x150] sm:$0xff]
        %v247 = vld [vmem:[%s196 + $0x158] sm:$0xff]
        %v248 = vld [vmem:[%s196 + $0x160] sm:$0xff]
        %v249 = vld [vmem:[%s196 + $0x168] sm:$0xff]
        %v250 = vld [vmem:[%s196 + $0x170] sm:$0xff]
        %v251 = vld [vmem:[%s196 + $0x178] sm:$0xff]
        %v252 = vld [vmem:[%s196 + $0x180] sm:$0xff]
        %v253 = vld [vmem:[%s196 + $0x188] sm:$0xff]
        %v254 = vld [vmem:[%s196 + $0x190] sm:$0xff]
        %v255 = vld [vmem:[%s196 + $0x198] sm:$0xff]
        %v256 = vld [vmem:[%s196 + $0x1a0] sm:$0xff]
        %v257 = vld [vmem:[%s196 + $0x1a8] sm:$0xff]
        %v258 = vld [vmem:[%s196 + $0x1b0] sm:$0xff]
        %v259 = vld [vmem:[%s196 + $0x1b8] sm:$0xff]
        %v260 = vld [vmem:[%s196 + $0x1c0] sm:$0xff]
        %v261 = vld [vmem:[%s196 + $0x1c8] sm:$0xff]
        %v262 = vld [vmem:[%s196 + $0x1d0] sm:$0xff]
        %v263 = vld [vmem:[%s196 + $0x1d8] sm:$0xff]
        %v264 = vld [vmem:[%s196 + $0x1e0] sm:$0xff]
        %v265 = vld [vmem:[%s196 + $0x1e8] sm:$0xff]
        %v266 = vld [vmem:[%s196 + $0x1f0] sm:$0xff]
        %v267 = vld [vmem:[%s196 + $0x1f8] sm:$0xff]
        %v268 = vld [vmem:[%s2] sm:$0xff]
        %v269 = vld [vmem:[%s2 + $0x8] sm:$0xff]
        %v270 = vld [vmem:[%s2 + $0x10] sm:$0xff]
        %v271 = vld [vmem:[%s2 + $0x18] sm:$0xff]
        %v272 = vld [vmem:[%s2 + $0x20] sm:$0xff]
        %274 = vset.pattern.permute.xlu0 0
        %275 = vperm.xlu0 %274, %v268
        %v276 = vpop.permute.xlu0 %275
        %279 = vset.pattern.permute.xlu0 0
        %280 = vperm.xlu0 %279, %v269
        %v281 = vpop.permute.xlu0 %280
        %284 = vset.pattern.permute.xlu0 0
        %285 = vperm.xlu0 %284, %v270
        %v286 = vpop.permute.xlu0 %285
        %289 = vset.pattern.permute.xlu0 0
        %290 = vperm.xlu0 %289, %v271
        %v291 = vpop.permute.xlu0 %290
        %294 = vset.pattern.permute.xlu0 0
        %295 = vperm.xlu0 %294, %v272
        %v296 = vpop.permute.xlu0 %295
        %vm298 = vcmask 785408
        %v300 = vsel %vm298, %v199, 0
        %v303 = vsel %vm298, %v200, 0
        %v306 = vsel %vm298, %v201, 0
        %v309 = vsel %vm298, %v202, 0
        %v312 = vsel %vm298, %v203, 0
        %v315 = vsel %vm298, %v204, 0
        %v318 = vsel %vm298, %v205, 0
        %v321 = vsel %vm298, %v206, 0
        %v324 = vsel %vm298, %v207, 0
        %v327 = vsel %vm298, %v208, 0
        %v330 = vsel %vm298, %v209, 0
        %v333 = vsel %vm298, %v210, 0
        %v336 = vsel %vm298, %v211, 0
        %v339 = vsel %vm298, %v212, 0
        %v342 = vsel %vm298, %v213, 0
        %v345 = vsel %vm298, %v214, 0
        %v348 = vsel %vm298, %v215, 0
        %v351 = vsel %vm298, %v216, 0
        %v354 = vsel %vm298, %v217, 0
        %v357 = vsel %vm298, %v218, 0
        %v360 = vsel %vm298, %v219, 0
        %v363 = vsel %vm298, %v220, 0
        %v366 = vsel %vm298, %v221, 0
        %v369 = vsel %vm298, %v222, 0
        %v372 = vsel %vm298, %v223, 0
        %v375 = vsel %vm298, %v224, 0
        %v378 = vsel %vm298, %v225, 0
        %v381 = vsel %vm298, %v226, 0
        %v384 = vsel %vm298, %v227, 0
        %v387 = vsel %vm298, %v228, 0
        %v390 = vsel %vm298, %v229, 0
        %v393 = vsel %vm298, %v230, 0
        %v396 = vsel %vm298, %v231, 0
        %v399 = vsel %vm298, %v232, 0
        %v402 = vsel %vm298, %v233, 0
        %v405 = vsel %vm298, %v234, 0
        %v408 = vsel %vm298, %v235, 0
        %v411 = vsel %vm298, %v236, 0
        %v414 = vsel %vm298, %v237, 0
        %v417 = vsel %vm298, %v238, 0
        %v420 = vsel %vm298, %v239, 0
        %v423 = vsel %vm298, %v240, 0
        %v426 = vsel %vm298, %v241, 0
        %v429 = vsel %vm298, %v242, 0
        %v432 = vsel %vm298, %v243, 0
        %v435 = vsel %vm298, %v244, 0
        %v438 = vsel %vm298, %v245, 0
        %v441 = vsel %vm298, %v246, 0
        %v444 = vsel %vm298, %v247, 0
        %v447 = vsel %vm298, %v248, 0
        %v450 = vsel %vm298, %v249, 0
        %v453 = vsel %vm298, %v250, 0
        %v456 = vsel %vm298, %v251, 0
        %v459 = vsel %vm298, %v252, 0
        %v462 = vsel %vm298, %v253, 0
        %v465 = vsel %vm298, %v254, 0
        %v468 = vsel %vm298, %v255, 0
        %v471 = vsel %vm298, %v256, 0
        %v474 = vsel %vm298, %v257, 0
        %v477 = vsel %vm298, %v258, 0
        %v480 = vsel %vm298, %v259, 0
        %v483 = vsel %vm298, %v260, 0
        %v486 = vsel %vm298, %v261, 0
        %v489 = vsel %vm298, %v262, 0
        %v492 = vsel %vm298, %v263, 0
        %v495 = vsel %vm298, %v264, 0
        %v498 = vsel %vm298, %v265, 0
        %v501 = vsel %vm298, %v266, 0
        %v504 = vsel %vm298, %v267, 0
        %506 = vmatprep.subr.mxu0 0.0
        %507 = vmatpush1.xpose.msra.mxu0 %v315
        %508 = vmatprep.subr.mxu0 0.0
        %509 = vmatpush1.xpose.msra.mxu0 %v318
        %510 = vmatprep.subr.mxu0 0.0
        %511 = vmatpush1.xpose.msra.mxu0 %v321
        %512 = vmatprep.subr.mxu0 0.0
        %513 = vmatpush1.xpose.msra.mxu0 %v324
        %514 = vmatprep.subr.mxu0 0.0
        %515 = vmatpush1.xpose.msra.mxu0 %v327
        %516 = vmatprep.subr.mxu0 0.0
        %517 = vmatpush1.xpose.msra.mxu0 %v330
        %518 = vmatprep.subr.mxu0 0.0
        %519 = vmatpush1.xpose.msra.mxu0 %v333
        %520 = vmatprep.subr.mxu0 0.0
        %521 = vmatpush1.xpose.msra.mxu0 %v336
        %522 = vmatprep.subr.mxu0 0.0
        %523 = vmatpush1.xpose.msra.mxu0 %v339
        %524 = vmatprep.subr.mxu0 0.0
        %525 = vmatpush1.xpose.msra.mxu0 %v342
        %526 = vmatprep.subr.mxu0 0.0
        %527 = vmatpush1.xpose.msra.mxu0 %v345
        %528 = vmatprep.subr.mxu0 0.0
        %529 = vmatpush1.xpose.msra.mxu0 %v348
        %530 = vmatprep.subr.mxu0 0.0
        %531 = vmatpush1.xpose.msra.mxu0 %v351
        %532 = vmatprep.subr.mxu0 0.0
        %533 = vmatpush1.xpose.msra.mxu0 %v354
        %534 = vmatprep.subr.mxu0 0.0
        %535 = vmatpush1.xpose.msra.mxu0 %v357
        %536 = vmatprep.subr.mxu0 0.0
        %537 = vmatpush1.xpose.msra.mxu0 %v360
        %538 = vmatprep.subr.mxu0 0.0
        %539 = vmatpush1.xpose.msra.mxu0 %v363
        %540 = vmatprep.subr.mxu0 0.0
        %541 = vmatpush1.xpose.msra.mxu0 %v366
        %542 = vmatprep.subr.mxu0 0.0
        %543 = vmatpush1.xpose.msra.mxu0 %v369
        %544 = vmatprep.subr.mxu0 0.0
        %545 = vmatpush1.xpose.msra.mxu0 %v372
        %546 = vmatprep.subr.mxu0 0.0
        %547 = vmatpush1.xpose.msra.mxu0 %v375
        %548 = vmatprep.subr.mxu0 0.0
        %549 = vmatpush1.xpose.msra.mxu0 %v378
        %550 = vmatprep.subr.mxu0 0.0
        %551 = vmatpush1.xpose.msra.mxu0 %v381
        %552 = vmatprep.subr.mxu0 0.0
        %553 = vmatpush1.xpose.msra.mxu0 %v384
        %554 = vmatprep.subr.mxu0 0.0
        %555 = vmatpush1.xpose.msra.mxu0 %v387
        %556 = vmatprep.subr.mxu0 0.0
        %557 = vmatpush1.xpose.msra.mxu0 %v390
        %558 = vmatprep.subr.mxu0 0.0
        %559 = vmatpush1.xpose.msra.mxu0 %v393
        %560 = vmatprep.subr.mxu0 0.0
        %561 = vmatpush1.xpose.msra.mxu0 %v396
        %562 = vmatprep.subr.mxu0 0.0
        %563 = vmatpush1.xpose.msra.mxu0 %v399
        %564 = vmatprep.subr.mxu0 0.0
        %565 = vmatpush1.xpose.msra.mxu0 %v402
        %566 = vmatprep.subr.mxu0 0.0
        %567 = vmatpush1.xpose.msra.mxu0 %v405
        %568 = vmatprep.subr.mxu0 0.0
        %569 = vmatpush1.xpose.msra.mxu0 %v408
        %570 = vmatprep.mubr.f32.mxu0 0.0
        %571 = vmatmul.mubr.f32.gmra.mrb[0].mxu0 %v300
        %v572 = vpop.f32.mrb[0].mxu0
        %v573 = vadd.f32 %v276, %v572
        %v574 = vpop.f32.mrb[0].mxu0
        %v575 = vadd.f32 %v276, %v574
        %576 = vmatprep.mubr.f32.mxu0 0.0
        %577 = vmatmul.mubr.f32.gmra.mrb[0].mxu0 %v303
        %v578 = vpop.f32.mrb[0].mxu0
        %v579 = vadd.f32 %v281, %v578
        %v580 = vpop.f32.mrb[0].mxu0
        %v581 = vadd.f32 %v281, %v580
        %582 = vmatprep.mubr.f32.mxu0 0.0
        %583 = vmatmul.mubr.f32.gmra.mrb[0].mxu0 %v306
        %v584 = vpop.f32.mrb[0].mxu0
        %v585 = vadd.f32 %v286, %v584
        %v586 = vpop.f32.mrb[0].mxu0
        %v587 = vadd.f32 %v286, %v586
        %588 = vmatprep.mubr.f32.mxu0 0.0
        %589 = vmatmul.mubr.f32.gmra.mrb[0].mxu0 %v309
        %v590 = vpop.f32.mrb[0].mxu0
        %v591 = vadd.f32 %v291, %v590
        %v592 = vpop.f32.mrb[0].mxu0
        %v593 = vadd.f32 %v291, %v592
        %594 = vmatprep.mubr.f32.mxu0 0.0
        %595 = vmatmul.mubr.f32.gmra.mrb[0].mxu0 %v312
        %v596 = vpop.f32.mrb[0].mxu0
        %v597 = vadd.f32 %v296, %v596
        %v598 = vpop.f32.mrb[0].mxu0
        %v599 = vadd.f32 %v296, %v598
        %600 = vdwg.mxu0
        %601 = vmatprep.subr.mxu0 0.0
        %602 = vmatpush1.xpose.msra.mxu0 %v411
        %603 = vmatprep.subr.mxu0 0.0
        %604 = vmatpush1.xpose.msra.mxu0 %v414
        %605 = vmatprep.subr.mxu0 0.0
        %606 = vmatpush1.xpose.msra.mxu0 %v417
        %607 = vmatprep.subr.mxu0 0.0
        %608 = vmatpush1.xpose.msra.mxu0 %v420
        %609 = vmatprep.subr.mxu0 0.0
        %610 = vmatpush1.xpose.msra.mxu0 %v423
        %611 = vmatprep.subr.mxu0 0.0
        %612 = vmatpush1.xpose.msra.mxu0 %v426
        %613 = vmatprep.subr.mxu0 0.0
        %614 = vmatpush1.xpose.msra.mxu0 %v429
        %615 = vmatprep.subr.mxu0 0.0
        %616 = vmatpush1.xpose.msra.mxu0 %v432
        %617 = vmatprep.subr.mxu0 0.0
        %618 = vmatpush1.xpose.msra.mxu0 %v435
        %619 = vmatprep.subr.mxu0 0.0
        %620 = vmatpush1.xpose.msra.mxu0 %v438
        %621 = vmatprep.subr.mxu0 0.0
        %622 = vmatpush1.xpose.msra.mxu0 %v441
        %623 = vmatprep.subr.mxu0 0.0
        %624 = vmatpush1.xpose.msra.mxu0 %v444
        %625 = vmatprep.subr.mxu0 0.0
        %626 = vmatpush1.xpose.msra.mxu0 %v447
        %627 = vmatprep.subr.mxu0 0.0
        %628 = vmatpush1.xpose.msra.mxu0 %v450
        %629 = vmatprep.subr.mxu0 0.0
        %630 = vmatpush1.xpose.msra.mxu0 %v453
        %631 = vmatprep.subr.mxu0 0.0
        %632 = vmatpush1.xpose.msra.mxu0 %v456
        %633 = vmatprep.subr.mxu0 0.0
        %634 = vmatpush1.xpose.msra.mxu0 %v459
        %635 = vmatprep.subr.mxu0 0.0
        %636 = vmatpush1.xpose.msra.mxu0 %v462
        %637 = vmatprep.subr.mxu0 0.0
        %638 = vmatpush1.xpose.msra.mxu0 %v465
        %639 = vmatprep.subr.mxu0 0.0
        %640 = vmatpush1.xpose.msra.mxu0 %v468
        %641 = vmatprep.subr.mxu0 0.0
        %642 = vmatpush1.xpose.msra.mxu0 %v471
        %643 = vmatprep.subr.mxu0 0.0
        %644 = vmatpush1.xpose.msra.mxu0 %v474
        %645 = vmatprep.subr.mxu0 0.0
        %646 = vmatpush1.xpose.msra.mxu0 %v477
        %647 = vmatprep.subr.mxu0 0.0
        %648 = vmatpush1.xpose.msra.mxu0 %v480
        %649 = vmatprep.subr.mxu0 0.0
        %650 = vmatpush1.xpose.msra.mxu0 %v483
        %651 = vmatprep.subr.mxu0 0.0
        %652 = vmatpush1.xpose.msra.mxu0 %v486
        %653 = vmatprep.subr.mxu0 0.0
        %654 = vmatpush1.xpose.msra.mxu0 %v489
        %655 = vmatprep.subr.mxu0 0.0
        %656 = vmatpush1.xpose.msra.mxu0 %v492
        %657 = vmatprep.subr.mxu0 0.0
        %658 = vmatpush1.xpose.msra.mxu0 %v495
        %659 = vmatprep.subr.mxu0 0.0
        %660 = vmatpush1.xpose.msra.mxu0 %v498
        %661 = vmatprep.subr.mxu0 0.0
        %662 = vmatpush1.xpose.msra.mxu0 %v501
        %663 = vmatprep.subr.mxu0 0.0
        %664 = vmatpush1.xpose.msra.mxu0 %v504
        %665 = vmatprep.mubr.f32.mxu0 0.0
        %666 = vmatmul.mubr.f32.gmra.mrb[0].mxu0 %v300
        %v667 = vpop.f32.mrb[0].mxu0
        %v668 = vadd.f32 %v276, %v667
        %v669 = vpop.f32.mrb[0].mxu0
        %v670 = vadd.f32 %v276, %v669
        %671 = vmatprep.mubr.f32.mxu0 0.0
        %672 = vmatmul.mubr.f32.gmra.mrb[0].mxu0 %v303
        %v673 = vpop.f32.mrb[0].mxu0
        %v674 = vadd.f32 %v281, %v673
        %v675 = vpop.f32.mrb[0].mxu0
        %v676 = vadd.f32 %v281, %v675
        %677 = vmatprep.mubr.f32.mxu0 0.0
        %678 = vmatmul.mubr.f32.gmra.mrb[0].mxu0 %v306
        %v679 = vpop.f32.mrb[0].mxu0
        %v680 = vadd.f32 %v286, %v679
        %v681 = vpop.f32.mrb[0].mxu0
        %v682 = vadd.f32 %v286, %v681
        %683 = vmatprep.mubr.f32.mxu0 0.0
        %684 = vmatmul.mubr.f32.gmra.mrb[0].mxu0 %v309
        %v685 = vpop.f32.mrb[0].mxu0
        %v686 = vadd.f32 %v291, %v685
        %v687 = vpop.f32.mrb[0].mxu0
        %v688 = vadd.f32 %v291, %v687
        %689 = vmatprep.mubr.f32.mxu0 0.0
        %690 = vmatmul.mubr.f32.gmra.mrb[0].mxu0 %v312
        %v691 = vpop.f32.mrb[0].mxu0
        %v692 = vadd.f32 %v296, %v691
        %v693 = vpop.f32.mrb[0].mxu0
        %v694 = vadd.f32 %v296, %v693
        %695 = vdwg.mxu0
        %v696 = vmax.f32 %v573, 0.0
        %v697 = vmax.f32 %v575, 0.0
        %v698 = vmax.f32 %v668, 0.0
        %v699 = vmax.f32 %v670, 0.0
        %v700 = vmax.f32 %v579, 0.0
        %v701 = vmax.f32 %v581, 0.0
        %v702 = vmax.f32 %v674, 0.0
        %v703 = vmax.f32 %v676, 0.0
        %v704 = vmax.f32 %v585, 0.0
        %v705 = vmax.f32 %v587, 0.0
        %v706 = vmax.f32 %v680, 0.0
        %v707 = vmax.f32 %v682, 0.0
        %v708 = vmax.f32 %v591, 0.0
        %v709 = vmax.f32 %v593, 0.0
        %v710 = vmax.f32 %v686, 0.0
        %v711 = vmax.f32 %v688, 0.0
        %v712 = vmax.f32 %v597, 0.0
        %v713 = vmax.f32 %v599, 0.0
        %v714 = vmax.f32 %v692, 0.0
        %v715 = vmax.f32 %v694, 0.0
        %v716 = vld [vmem:[%s3] sm:$0x1]
        %vm717 = vcmask 326656
        %v719 = vsel %vm717, %v716, 0
        %721 = vmatprep.subr.mxu0 %v697
        %722 = vmatpush1.msra.mxu0 %v696
        %723 = vmatprep.subr.mxu0 %v701
        %724 = vmatpush1.msra.mxu0 %v700
        %725 = vmatprep.subr.mxu0 %v705
        %726 = vmatpush1.msra.mxu0 %v704
        %727 = vmatprep.subr.mxu0 %v709
        %728 = vmatpush1.msra.mxu0 %v708
        %729 = vmatprep.subr.mxu0 %v713
        %730 = vmatpush1.msra.mxu0 %v712
        %731 = vmatprep.subr.mxu0 0.0
        %732 = vmatpush1.msra.mxu0 0.0
        %733 = vmatprep.subr.mxu0 0.0
        %734 = vmatpush1.msra.mxu0 0.0
        %735 = vmatprep.subr.mxu0 0.0
        %736 = vmatpush1.msra.mxu0 0.0
        %737 = vmatprep.subr.mxu0 0.0
        %738 = vmatpush1.msra.mxu0 0.0
        %739 = vmatprep.subr.mxu0 0.0
        %740 = vmatpush1.msra.mxu0 0.0
        %741 = vmatprep.subr.mxu0 0.0
        %742 = vmatpush1.msra.mxu0 0.0
        %743 = vmatprep.subr.mxu0 0.0
        %744 = vmatpush1.msra.mxu0 0.0
        %745 = vmatprep.subr.mxu0 0.0
        %746 = vmatpush1.msra.mxu0 0.0
        %747 = vmatprep.subr.mxu0 0.0
        %748 = vmatpush1.msra.mxu0 0.0
        %749 = vmatprep.subr.mxu0 0.0
        %750 = vmatpush1.msra.mxu0 0.0
        %751 = vmatprep.subr.mxu0 0.0
        %752 = vmatpush1.msra.mxu0 0.0
        %753 = vmatprep.subr.mxu0 0.0
        %754 = vmatpush1.msra.mxu0 0.0
        %755 = vmatprep.subr.mxu0 0.0
        %756 = vmatpush1.msra.mxu0 0.0
        %757 = vmatprep.subr.mxu0 0.0
        %758 = vmatpush1.msra.mxu0 0.0
        %759 = vmatprep.subr.mxu0 0.0
        %760 = vmatpush1.msra.mxu0 0.0
        %761 = vmatprep.subr.mxu0 0.0
        %762 = vmatpush1.msra.mxu0 0.0
        %763 = vmatprep.subr.mxu0 0.0
        %764 = vmatpush1.msra.mxu0 0.0
        %765 = vmatprep.subr.mxu0 0.0
        %766 = vmatpush1.msra.mxu0 0.0
        %767 = vmatprep.subr.mxu0 0.0
        %768 = vmatpush1.msra.mxu0 0.0
        %769 = vmatprep.subr.mxu0 0.0
        %770 = vmatpush1.msra.mxu0 0.0
        %771 = vmatprep.subr.mxu0 0.0
        %772 = vmatpush1.msra.mxu0 0.0
        %773 = vmatprep.subr.mxu0 0.0
        %774 = vmatpush1.msra.mxu0 0.0
        %775 = vmatprep.subr.mxu0 0.0
        %776 = vmatpush1.msra.mxu0 0.0
        %777 = vmatprep.subr.mxu0 0.0
        %778 = vmatpush1.msra.mxu0 0.0
        %779 = vmatprep.subr.mxu0 0.0
        %780 = vmatpush1.msra.mxu0 0.0
        %781 = vmatprep.subr.mxu0 0.0
        %782 = vmatpush1.msra.mxu0 0.0
        %783 = vmatprep.subr.mxu0 0.0
        %784 = vmatpush1.msra.mxu0 0.0
        %785 = vmatprep.mubr.f32.mxu0 0.0
        %786 = vmatmul.mubr.f32.gmra.mrb[0].mxu0 %v719
        %v787 = vpop.f32.mrb[0].mxu0
        %v788 = vadd.f32 0.0, %v787
        %v789 = vpop.f32.mrb[0].mxu0
        %v790 = vadd.f32 0.0, %v789
        %791 = vdwg.mxu0
        %792 = vmatprep.subr.mxu0 %v699
        %793 = vmatpush1.msra.mxu0 %v698
        %794 = vmatprep.subr.mxu0 %v703
        %795 = vmatpush1.msra.mxu0 %v702
        %796 = vmatprep.subr.mxu0 %v707
        %797 = vmatpush1.msra.mxu0 %v706
        %798 = vmatprep.subr.mxu0 %v711
        %799 = vmatpush1.msra.mxu0 %v710
        %800 = vmatprep.subr.mxu0 %v715
        %801 = vmatpush1.msra.mxu0 %v714
        %802 = vmatprep.subr.mxu0 0.0
        %803 = vmatpush1.msra.mxu0 0.0
        %804 = vmatprep.subr.mxu0 0.0
        %805 = vmatpush1.msra.mxu0 0.0
        %806 = vmatprep.subr.mxu0 0.0
        %807 = vmatpush1.msra.mxu0 0.0
        %808 = vmatprep.subr.mxu0 0.0
        %809 = vmatpush1.msra.mxu0 0.0
        %810 = vmatprep.subr.mxu0 0.0
        %811 = vmatpush1.msra.mxu0 0.0
        %812 = vmatprep.subr.mxu0 0.0
        %813 = vmatpush1.msra.mxu0 0.0
        %814 = vmatprep.subr.mxu0 0.0
        %815 = vmatpush1.msra.mxu0 0.0
        %816 = vmatprep.subr.mxu0 0.0
        %817 = vmatpush1.msra.mxu0 0.0
        %818 = vmatprep.subr.mxu0 0.0
        %819 = vmatpush1.msra.mxu0 0.0
        %820 = vmatprep.subr.mxu0 0.0
        %821 = vmatpush1.msra.mxu0 0.0
        %822 = vmatprep.subr.mxu0 0.0
        %823 = vmatpush1.msra.mxu0 0.0
        %824 = vmatprep.subr.mxu0 0.0
        %825 = vmatpush1.msra.mxu0 0.0
        %826 = vmatprep.subr.mxu0 0.0
        %827 = vmatpush1.msra.mxu0 0.0
        %828 = vmatprep.subr.mxu0 0.0
        %829 = vmatpush1.msra.mxu0 0.0
        %830 = vmatprep.subr.mxu0 0.0
        %831 = vmatpush1.msra.mxu0 0.0
        %832 = vmatprep.subr.mxu0 0.0
        %833 = vmatpush1.msra.mxu0 0.0
        %834 = vmatprep.subr.mxu0 0.0
        %835 = vmatpush1.msra.mxu0 0.0
        %836 = vmatprep.subr.mxu0 0.0
        %837 = vmatpush1.msra.mxu0 0.0
        %838 = vmatprep.subr.mxu0 0.0
        %839 = vmatpush1.msra.mxu0 0.0
        %840 = vmatprep.subr.mxu0 0.0
        %841 = vmatpush1.msra.mxu0 0.0
        %842 = vmatprep.subr.mxu0 0.0
        %843 = vmatpush1.msra.mxu0 0.0
        %844 = vmatprep.subr.mxu0 0.0
        %845 = vmatpush1.msra.mxu0 0.0
        %846 = vmatprep.subr.mxu0 0.0
        %847 = vmatpush1.msra.mxu0 0.0
        %848 = vmatprep.subr.mxu0 0.0
        %849 = vmatpush1.msra.mxu0 0.0
        %850 = vmatprep.subr.mxu0 0.0
        %851 = vmatpush1.msra.mxu0 0.0
        %852 = vmatprep.subr.mxu0 0.0
        %853 = vmatpush1.msra.mxu0 0.0
        %854 = vmatprep.subr.mxu0 0.0
        %855 = vmatpush1.msra.mxu0 0.0
        %856 = vmatprep.mubr.f32.mxu0 0.0
        %857 = vmatmul.mubr.f32.gmra.mrb[0].mxu0 %v719
        %v858 = vpop.f32.mrb[0].mxu0
        %v859 = vadd.f32 0.0, %v858
        %v860 = vpop.f32.mrb[0].mxu0
        %v861 = vadd.f32 0.0, %v860
        %862 = vdwg.mxu0
        %v863 = vmax.f32 %v788, 0.0
        %v864 = vmax.f32 %v790, 0.0
        %v865 = vmax.f32 %v859, 0.0
        %v866 = vmax.f32 %v861, 0.0
        %v867 = vxor.u32 %v863, 2147483648
        %v868 = vxor.u32 %v864, 2147483648
        %v869 = vxor.u32 %v865, 2147483648
        %v870 = vxor.u32 %v866, 2147483648
        %v871 = vmul.f32 %v867, 1.442695
        %v872 = vpow.pop %v871
        %v873 = vmul.f32 %v868, 1.442695
        %v874 = vpow.pop %v873
        %v875 = vmul.f32 %v869, 1.442695
        %v876 = vpow.pop %v875
        %v877 = vmul.f32 %v870, 1.442695
        %v878 = vpow.pop %v877
        %v879 = vadd.f32 %v872, 1.0
        %v880 = vadd.f32 %v874, 1.0
        %v881 = vadd.f32 %v876, 1.0
        %v882 = vadd.f32 %v878, 1.0
        %v883 = vrcp.pop %v879
        %v884 = vmul.f32 1.0, %v883
        %v885 = vrcp.pop %v880
        %v886 = vmul.f32 1.0, %v885
        %v887 = vrcp.pop %v881
        %v888 = vmul.f32 1.0, %v887
        %v889 = vrcp.pop %v882
        %v890 = vmul.f32 1.0, %v889
        %v895 = vcombine.low %v884, %v886
        %v896 = vcombine.low %v888, %v890
        %v898 = vunpack.c.l.s4 1966171168
        %v899 = vunpack.c.0.s8 %v898
        %v900 = vlaneseq
        %v901 = vshrl.u32 %v900, 7
        %v902 = vsub.s32 %v899, %v901
        %v903 = vrot.slane %v895, %v902
        %v905 = vunpack.c.l.s4 1966171168
        %v906 = vunpack.c.0.s8 %v905
        %v907 = vlaneseq
        %v908 = vshrl.u32 %v907, 7
        %v909 = vsub.s32 %v906, %v908
        %v910 = vrot.slane %v896, %v909
        %v911 = vcombine.low %v903, %v910
        %v913 = vunpack.c.l.s4 1966171168
        %v914 = vunpack.c.0.s8 %v913
        %v915 = vlaneseq
        %v916 = vshrl.u32 %v915, 7
        %v917 = vsub.s32 %v914, %v916
        %v918 = vrot.slane %v911, %v917
        %v920 = vlaneseq
        %vm921 = vcmp.ge.s32.totalorder %v920, 0
        %vm922 = vcmp.lt.s32.totalorder %v920, 512
        %vm923 = vmand %vm921, %vm922
        %924 = vst.msk [vmem:[%s191] sm:$0xf] %vm923, %v918
        %s925 = sand.u32 %s115, 1
        %s926 = scalar_lea.sflag [#allocation3], %s925
        %s927 = sand.u32 %s115, 1
        %s928 = smul.addr %s927, 4
        %s929 = scalar_lea.vmem [#allocation2], %s928
        // Predicated region
        $region37: #{_lambda_.2} parent=35 // pred_check
          %p930 = pneg %p125
        $region38: #{_lambda_.2} parent=35 // pred_check_branch
          %932 = sbr.rel (%p930) target = $region40
        $region39: #{_lambda_.2} parent=35 // pred_region
          %s933 = smul.u32 4, %s18
          %s935 = ssub.s32 64, 64
          %936 = vsyncadd %s926, %s935
          %s937 = smul.addr %s933, 16
          %s938 = scalar_lea.hbm %s4, %s937
          %s940 = sshll.u32 %s929, 4
          %s941 = int_to_ptr.vmem [resolvable:$true] %s940
          %943 = dma.vmem_to_hbm [thread:$0]  %s941, 64, %s938, %s926
        $region40: #{_lambda_.2} parent=35 // pred_fallthru
          _
      $region36: #{_lambda_.2} parent=5 // pred_fallthru
        _
      %p944 = scmp.le.s32.totalorder 2, %s13
      // Predicated region
      $region41: #{_lambda_.2} parent=5 // pred_check
        %p945 = pneg %p944
      $region42: #{_lambda_.2} parent=5 // pred_check_branch
        %947 = sbr.rel (%p945) target = $region44
      $region43: #{_lambda_.2} parent=5 // pred_region
        %s948 = ssub.s32 %s13, 2
        // Predicated region
        $region45: #{_lambda_.2} parent=43 // pred_check
          %p949 = pneg %p131
        $region46: #{_lambda_.2} parent=43 // pred_check_branch
          %951 = sbr.rel (%p949) target = $region48
        $region47: #{_lambda_.2} parent=43 // pred_region
          %s952 = sand.u32 %s116, 1
          %s953 = scalar_lea.sflag [#allocation3], %s952
          %s954 = sand.u32 %s116, 1
          %s955 = smul.addr %s954, 4
          %s956 = scalar_lea.vmem [#allocation2], %s955
          %957 = dma.done %s953, 64
        $region48: #{_lambda_.2} parent=43 // pred_fallthru
          _
      $region44: #{_lambda_.2} parent=5 // pred_fallthru
        _
    $region6: #{_lambda_.2} parent=1 // loop_footer
      %s17 = sadd.s32 1, %s13
    $region7: #{_lambda_.2} parent=1 // loop_footer_branch
      %12 = sbr.rel target = $region3
    $region8: #{_lambda_.2} parent=1 // loop_exit
      _
    %958 = vsyncpa [#allocation3], 1
    %s959 = scalar_lea.sflag [#allocation3], 1
    %960 = vsyncpa %s959, 1

</llo_original>
